<compile_context>
chip_gen: v7x
topology: tpu7x:2x2x1
jax: 0.10.0
libtpu: 0.0.40
codegen_flags: <defaults>
</compile_context>

<pallas_src>
import functools

import jax
import jax.numpy as jnp
from jax.experimental import pallas as pl
from jax.experimental.pallas import tpu as pltpu


def _nce_ranking_kernel(scores_ref, labels_ref, out_ref, *, alpha, margin,
                        n_valid):
    # scores_ref: (C, Bt) in the input dtype; candidates on sublanes,
    #             batch on the 128-wide lane axis.
    s = scores_ref[...].astype(jnp.float32)                      # (C, Bt)
    labels = labels_ref[...]                                     # (1, Bt) int32
    C, Bt = s.shape

    # --- per-item logsumexp over candidates (sublane axis), exact & stable ---
    m = jnp.max(s, axis=0, keepdims=True)                        # (1, Bt)
    z = jnp.sum(jnp.exp(s - m), axis=0, keepdims=True)           # (1, Bt)
    lse = m + jnp.log(z)                                         # (1, Bt)

    # --- per-item NLL = lse - s[label]  (one-hot gather, no log_probs) ---
    cand = jax.lax.broadcasted_iota(jnp.int32, (C, Bt), 0)
    s_label = jnp.sum(jnp.where(cand == labels, s, 0.0),
                      axis=0, keepdims=True)                     # (1, Bt)
    nll = lse - s_label                                          # (1, Bt)

    # --- pairwise hinge vs. candidate 0; drop the column-0 self term ---
    pos = s[0:1, :]                                              # (1, Bt)
    hinge = jnp.maximum(jnp.float32(margin) - (pos - s), 0.0)    # (C, Bt)
    hinge_sum = (jnp.sum(hinge, axis=0, keepdims=True)
                 - jnp.float32(max(float(margin), 0.0)))         # (1, Bt)

    # --- mask padded batch columns, fold in static normalizers ---
    col = pl.program_id(0) * Bt + jax.lax.broadcasted_iota(
        jnp.int32, (1, Bt), 1)
    valid = (col < n_valid).astype(jnp.float32)
    inv_b = 1.0 / float(n_valid)
    inv_rank = float(alpha) / float(n_valid * (C - 1)) if C > 1 else 0.0
    out_ref[...] = valid * (nll * inv_b + hinge_sum * inv_rank)


def enhanced_nce_loss_ranking(scores, labels, alpha=1.0, margin=1.0,
                              block_b=512):
    """scores: (B, C) float (any dtype), labels: (B,) int -> scalar f32 loss."""
    B, C = scores.shape

    # Lane-dense batch tile (multiple of 128); don't over-pad small batches.
    block_b = min(int(block_b), pl.cdiv(B, 128) * 128)
    block_b = max(128, (block_b // 128) * 128)
    b_pad = pl.cdiv(B, block_b) * block_b
    grid = (b_pad // block_b,)

    # Layout plumbing only (no f32 cast): batch on the lane axis.
    scores_t = jnp.pad(scores, ((0, b_pad - B), (0, 0))).T           # (C, b_pad)
    labels_t = jnp.pad(labels.astype(jnp.int32),
                       (0, b_pad - B)).reshape(1, b_pad)             # (1, b_pad)

    kernel = functools.partial(_nce_ranking_kernel, alpha=float(alpha),
                               margin=float(margin), n_valid=B)

    per_item = pl.pallas_call(
        kernel,
        out_shape=jax.ShapeDtypeStruct((1, b_pad), jnp.float32),
        grid=grid,
        in_specs=[
            pl.BlockSpec((C, block_b), lambda i: (0, i)),
            pl.BlockSpec((1, block_b), lambda i: (0, i)),
        ],
        out_specs=pl.BlockSpec((1, block_b), lambda i: (0, i)),
        compiler_params=pltpu.CompilerParams(
            dimension_semantics=("parallel",)),
    )(scores_t, labels_t)

    # Tiny final reduction (B elements) outside the kernel.
    return jnp.sum(per_item)


def _reference(scores, labels, alpha=1.0, margin=1.0):
    # Pure-JAX reference mirroring the PyTorch module semantics.
    B, C = scores.shape
    s = scores.astype(jnp.float32)
    log_probs = jax.nn.log_softmax(s, axis=1)
    nce = -jnp.mean(log_probs[jnp.arange(B), labels])
    pos = s[:, 0:1]
    neg = s[:, 1:]
    ranking = jnp.sum(jnp.maximum(margin - (pos - neg), 0.0))
    return nce + alpha * ranking / (B * (C - 1))


if __name__ == "__main__":
    key = jax.random.PRNGKey(0)
    k1, k2, k3, k4 = jax.random.split(key, 4)

    # Case 1: batch not a multiple of the tile -> multi-step grid + masking.
    B1, C1 = 300, 16
    scores1 = jax.random.normal(k1, (B1, C1), dtype=jnp.float32)
    labels1 = jax.random.randint(k2, (B1,), 0, C1, dtype=jnp.int32)
    loss1 = jax.block_until_ready(
        enhanced_nce_loss_ranking(scores1, labels1, alpha=1.0, margin=1.0,
                                  block_b=128))
    ref1 = _reference(scores1, labels1, alpha=1.0, margin=1.0)
    assert jnp.allclose(loss1, ref1, rtol=1e-4, atol=1e-4), (loss1, ref1)

    # Case 2: small batch / few candidates, non-default alpha & margin.
    B2, C2 = 8, 4
    scores2 = jax.random.normal(k3, (B2, C2), dtype=jnp.float32)
    labels2 = jax.random.randint(k4, (B2,), 0, C2, dtype=jnp.int32)
    loss2 = jax.block_until_ready(
        enhanced_nce_loss_ranking(scores2, labels2, alpha=0.5, margin=0.7))
    ref2 = _reference(scores2, labels2, alpha=0.5, margin=0.7)
    assert jnp.allclose(loss2, ref2, rtol=1e-4, atol=1e-4), (loss2, ref2)

    print("KERNEL_OK")
</pallas_src>

<mosaic_0001>
module attributes {stable_mosaic.version = 11 : i64} {
  func.func @_nce_ranking_kernel(%arg0: i32, %arg1: memref<16x128xf32, #tpu.memory_space<vmem>>, %arg2: memref<1x128xi32, #tpu.memory_space<vmem>>, %arg3: memref<1x128xf32, #tpu.memory_space<vmem>>) attributes {dimension_semantics = [#tpu.dimension_semantics<parallel>], iteration_bounds = array<i64: 3>, scalar_prefetch = 0 : i64, scratch_operands = 0 : i64, tpu.core_type = #tpu.core_type<tc>, window_params = [{transform_indices = @transform_0, window_bounds = array<i64: 16, 128>}, {transform_indices = @transform_1, window_bounds = array<i64: 1, 128>}, {transform_indices = @transform_2, window_bounds = array<i64: 1, 128>}]} {
    %c0 = arith.constant 0 : index
    %c0_0 = arith.constant 0 : index
    %0 = vector.load %arg1[%c0, %c0_0] : memref<16x128xf32, #tpu.memory_space<vmem>>, vector<16x128xf32>
    %c0_1 = arith.constant 0 : index
    %c0_2 = arith.constant 0 : index
    %1 = vector.load %arg2[%c0_1, %c0_2] : memref<1x128xi32, #tpu.memory_space<vmem>>, vector<1x128xi32>
    %cst = arith.constant dense<0xFF800000> : vector<128xf32>
    %2 = vector.multi_reduction <maximumf>, %0, %cst [0] : vector<16x128xf32> to vector<128xf32>
    %3 = vector.shape_cast %2 : vector<128xf32> to vector<1x128xf32>
    %4 = vector.broadcast %3 : vector<1x128xf32> to vector<16x128xf32>
    %5 = arith.subf %0, %4 : vector<16x128xf32>
    %6 = math.exp %5 : vector<16x128xf32>
    %cst_3 = arith.constant dense<0.000000e+00> : vector<128xf32>
    %7 = vector.multi_reduction <add>, %6, %cst_3 [0] : vector<16x128xf32> to vector<128xf32>
    %8 = vector.shape_cast %7 : vector<128xf32> to vector<1x128xf32>
    %9 = math.log %8 : vector<1x128xf32>
    %10 = arith.addf %3, %9 : vector<1x128xf32>
    %11 = tpu.iota {dimensions = array<i32: 0>} : vector<16x128xi32>
    %12 = vector.broadcast %1 : vector<1x128xi32> to vector<16x128xi32>
    %13 = arith.cmpi eq, %11, %12 : vector<16x128xi32>
    %cst_4 = arith.constant 0.000000e+00 : f32
    %14 = vector.broadcast %cst_4 : f32 to vector<16x128xf32>
    %15 = arith.select %13, %0, %14 : vector<16x128xi1>, vector<16x128xf32>
    %cst_5 = arith.constant dense<0.000000e+00> : vector<128xf32>
    %16 = vector.multi_reduction <add>, %15, %cst_5 [0] : vector<16x128xf32> to vector<128xf32>
    %17 = vector.shape_cast %16 : vector<128xf32> to vector<1x128xf32>
    %18 = arith.subf %10, %17 : vector<1x128xf32>
    %19 = vector.extract_strided_slice %0 {offsets = [0, 0], sizes = [1, 128], strides = [1, 1]} : vector<16x128xf32> to vector<1x128xf32>
    %20 = vector.broadcast %19 : vector<1x128xf32> to vector<16x128xf32>
    %21 = arith.subf %20, %0 : vector<16x128xf32>
    %cst_6 = arith.constant 1.000000e+00 : f32
    %22 = vector.broadcast %cst_6 : f32 to vector<16x128xf32>
    %23 = arith.subf %22, %21 : vector<16x128xf32>
    %cst_7 = arith.constant 0.000000e+00 : f32
    %24 = vector.broadcast %cst_7 : f32 to vector<16x128xf32>
    %25 = arith.maximumf %23, %24 : vector<16x128xf32>
    %cst_8 = arith.constant dense<0.000000e+00> : vector<128xf32>
    %26 = vector.multi_reduction <add>, %25, %cst_8 [0] : vector<16x128xf32> to vector<128xf32>
    %27 = vector.shape_cast %26 : vector<128xf32> to vector<1x128xf32>
    %cst_9 = arith.constant 1.000000e+00 : f32
    %28 = vector.broadcast %cst_9 : f32 to vector<1x128xf32>
    %29 = arith.subf %27, %28 : vector<1x128xf32>
    %c128_i32 = arith.constant 128 : i32
    %30 = arith.muli %arg0, %c128_i32 : i32
    %31 = tpu.iota {dimensions = array<i32: 1>} : vector<1x128xi32>
    %32 = vector.broadcast %30 : i32 to vector<1x128xi32>
    %33 = arith.addi %32, %31 : vector<1x128xi32>
    %c300_i32 = arith.constant 300 : i32
    %34 = vector.broadcast %c300_i32 : i32 to vector<1x128xi32>
    %35 = arith.cmpi slt, %33, %34 : vector<1x128xi32>
    %36 = arith.extui %35 : vector<1x128xi1> to vector<1x128xi32>
    %37 = arith.sitofp %36 : vector<1x128xi32> to vector<1x128xf32>
    %cst_10 = arith.constant 0.00333333341 : f32
    %38 = vector.broadcast %cst_10 : f32 to vector<1x128xf32>
    %39 = arith.mulf %18, %38 : vector<1x128xf32>
    %cst_11 = arith.constant 2.22222225E-4 : f32
    %40 = vector.broadcast %cst_11 : f32 to vector<1x128xf32>
    %41 = arith.mulf %29, %40 : vector<1x128xf32>
    %42 = arith.addf %39, %41 : vector<1x128xf32>
    %43 = arith.mulf %37, %42 : vector<1x128xf32>
    %c0_12 = arith.constant 0 : index
    %c0_13 = arith.constant 0 : index
    %44 = vector.load %arg3[%c0_12, %c0_13] : memref<1x128xf32, #tpu.memory_space<vmem>>, vector<1x128xf32>
    tpu.vector_store %arg3[%c0_12, %c0_13], %43 {strides = array<i32>} : memref<1x128xf32, #tpu.memory_space<vmem>>, vector<1x128xf32>,
    return
  }
  func.func @transform_0(%arg0: i32) -> (i32, i32) {
    %c0_i32 = arith.constant 0 : i32
    %c0_i32_0 = arith.constant 0 : i32
    return %c0_i32, %arg0 : i32, i32
  }
  func.func @transform_1(%arg0: i32) -> (i32, i32) {
    %c0_i32 = arith.constant 0 : i32
    %c0_i32_0 = arith.constant 0 : i32
    return %c0_i32, %arg0 : i32, i32
  }
  func.func @transform_2(%arg0: i32) -> (i32, i32) {
    %c0_i32 = arith.constant 0 : i32
    %c0_i32_0 = arith.constant 0 : i32
    return %c0_i32, %arg0 : i32, i32
  }
}

</mosaic_0001>

<llo_original>
// kernel: tpu_custom_call.1
$region0: #{tpu_custom_call.1}
  #allocation0 [shape = 'u32[]', space=smem, size = 0x4, offset = 0x4, fixed_abs, tag = 'smem constant byte address 0x4 - core index']
  #allocation1 [shape = 'u32[144,128]{1,0:T(1,128)}', space=vmem, size = 0x12000, scoped, tag = 'internal scratch']
  %s0 = inlined_call_operand.hbm [shape: f32[16,384], index: 0, kind: input, shape index: {}]
  %s1 = inlined_call_operand.vmem [shape: s32[1,384], index: 1, kind: input, shape index: {}]
  %s2 = inlined_call_operand.hbm [shape: f32[1,384], index: 2, kind: output, shape index: {}]
  %s3 = sld [smem:[#allocation0]]
  $region45: #{tpu_custom_call.1} parent=0
    _
  %s5 = ssub.s32 1, %s3
  %s6 = scalar_select 0, %s5, %s3
  $region1: #{tpu_custom_call.1} parent=0
    #allocation2 [shape = 'u8[16384]{0}', space=vmem, size = 0x4000, scoped, tag = 'input window, operand 0']
    #allocation3 [shape = 's32[2]{0}', space=sflag, size = 0x8, scoped, tag = 'scoped memory for tpu_custom_call.1']
    #allocation4 [shape = 's32[2]{0}', space=sflag, size = 0x8, scoped, tag = 'scoped memory for tpu_custom_call.1']
    #allocation5 [shape = 'u8[1024]{0}', space=vmem, size = 0x400, scoped, tag = 'output window, operand 0']
    %7 = vsyncpa [#allocation3], 0
    %s8 = scalar_lea.sflag [#allocation3], 1
    %9 = vsyncpa %s8, 0
    %10 = vsyncpa [#allocation4], 0
    %s11 = scalar_lea.sflag [#allocation4], 1
    %12 = vsyncpa %s11, 0
    loop: start=0, step=1, limit=5
    $region2: #{tpu_custom_call.1} parent=1 // loop_pre_header
      _
    $region3: #{tpu_custom_call.1} parent=1 // loop_header
      %s14 = sphi 0, %s18
      %p15 = scmp.ge.s32.totalorder %s14, 5
      %s24 = sphi 0, %s26
      %s27 = sphi 0, %s24
      %s28 = sphi 0, %s27
      %s44 = sphi 0, %s28
      %s50 = sphi 0, %s52
      %s53 = sphi 0, %s50
      %s54 = sphi 0, %s53
      %s70 = sphi 0, %s54
      %s76 = sphi 0, %s78
      %s79 = sphi 0, %s76
      %s80 = sphi 0, %s79
      %s96 = sphi 0, %s80
    $region4: #{tpu_custom_call.1} parent=1 // loop_header_branch
      %17 = sbr.rel (%p15) target = $region8
    $region5: #{tpu_custom_call.1} parent=1 // loop_body
      %s19 = ssub.s32 %s14, 1
      %s20 = ssub.s32 %s14, 2
      %s21 = sadd.s32 %s14, 1
      %s22 = ssub.s32 %s14, %s21
      %p23 = scmp.eq.s32.totalorder %s22, 0
      %s25 = sadd.s32 %s24, 1
      %s26 = scalar_select %p23, %s24, %s25
      %p29 = pneg %p23
      %p30 = scmp.eq.s32.totalorder %s14, 2
      %p31 = por %p29, %p30
      %p32 = scmp.ne.s32.totalorder %s24, %s27
      %p33 = scmp.eq.s32.totalorder %s14, 0
      %p34 = por %p32, %p33
      %p35 = scmp.ne.s32.totalorder %s24, %s27
      %p36 = scmp.eq.s32.totalorder %s19, 2
      %p37 = por %p35, %p36
      %p38 = scmp.ne.s32.totalorder %s27, %s28
      %p39 = scmp.eq.s32.totalorder %s19, 0
      %p40 = por %p38, %p39
      %p41 = scmp.ne.s32.totalorder %s27, %s28
      %p42 = scmp.eq.s32.totalorder %s20, 2
      %p43 = por %p41, %p42
      %p45 = scmp.ne.s32.totalorder %s28, %s44
      %p46 = scmp.eq.s32.totalorder %s20, 0
      %p47 = por %p45, %p46
      %s48 = ssub.s32 %s14, %s21
      %p49 = scmp.eq.s32.totalorder %s48, 0
      %s51 = sadd.s32 %s50, 1
      %s52 = scalar_select %p49, %s50, %s51
      %p55 = pneg %p49
      %p56 = scmp.eq.s32.totalorder %s14, 2
      %p57 = por %p55, %p56
      %p58 = scmp.ne.s32.totalorder %s50, %s53
      %p59 = scmp.eq.s32.totalorder %s14, 0
      %p60 = por %p58, %p59
      %p61 = scmp.ne.s32.totalorder %s50, %s53
      %p62 = scmp.eq.s32.totalorder %s19, 2
      %p63 = por %p61, %p62
      %p64 = scmp.ne.s32.totalorder %s53, %s54
      %p65 = scmp.eq.s32.totalorder %s19, 0
      %p66 = por %p64, %p65
      %p67 = scmp.ne.s32.totalorder %s53, %s54
      %p68 = scmp.eq.s32.totalorder %s20, 2
      %p69 = por %p67, %p68
      %p71 = scmp.ne.s32.totalorder %s54, %s70
      %p72 = scmp.eq.s32.totalorder %s20, 0
      %p73 = por %p71, %p72
      %s74 = ssub.s32 %s14, %s21
      %p75 = scmp.eq.s32.totalorder %s74, 0
      %s77 = sadd.s32 %s76, 1
      %s78 = scalar_select %p75, %s76, %s77
      %p81 = pneg %p75
      %p82 = scmp.eq.s32.totalorder %s14, 2
      %p83 = por %p81, %p82
      %p84 = scmp.ne.s32.totalorder %s76, %s79
      %p85 = scmp.eq.s32.totalorder %s14, 0
      %p86 = por %p84, %p85
      %p87 = scmp.ne.s32.totalorder %s76, %s79
      %p88 = scmp.eq.s32.totalorder %s19, 2
      %p89 = por %p87, %p88
      %p90 = scmp.ne.s32.totalorder %s79, %s80
      %p91 = scmp.eq.s32.totalorder %s19, 0
      %p92 = por %p90, %p91
      %p93 = scmp.ne.s32.totalorder %s79, %s80
      %p94 = scmp.eq.s32.totalorder %s20, 2
      %p95 = por %p93, %p94
      %p97 = scmp.ne.s32.totalorder %s80, %s96
      %p98 = scmp.eq.s32.totalorder %s20, 0
      %p99 = por %p97, %p98
      %p100 = scmp.le.s32.totalorder 1, %s14
      %p101 = scmp.lt.s32.totalorder %s14, 4
      %p102 = pnand %p100, %p101
      %p103 = pneg %p102
      // Predicated region
      $region9: #{tpu_custom_call.1} parent=5 // pred_check
        _
      $region10: #{tpu_custom_call.1} parent=5 // pred_check_branch
        %105 = sbr.rel (%p102) target = $region12
      $region11: #{tpu_custom_call.1} parent=5 // pred_region
        %s106 = ssub.s32 %s14, 1
      $region12: #{tpu_custom_call.1} parent=5 // pred_fallthru
        _
      %p107 = scmp.lt.s32.totalorder %s14, 3
      // Predicated region
      $region13: #{tpu_custom_call.1} parent=5 // pred_check
        %p108 = pneg %p107
      $region14: #{tpu_custom_call.1} parent=5 // pred_check_branch
        %110 = sbr.rel (%p108) target = $region16
      $region15: #{tpu_custom_call.1} parent=5 // pred_region
        // Predicated region
        $region17: #{tpu_custom_call.1} parent=15 // pred_check
          %p111 = pneg %p34
        $region18: #{tpu_custom_call.1} parent=15 // pred_check_branch
          %113 = sbr.rel (%p111) target = $region20
        $region19: #{tpu_custom_call.1} parent=15 // pred_region
          %s114 = sand.u32 %s24, 1
          %s115 = scalar_lea.sflag [#allocation3], %s114
          %s116 = sand.u32 %s24, 1
          %s117 = smul.addr %s116, 16
          %s118 = scalar_lea.vmem [#allocation2], %s117
          %s120 = ssub.s32 256, 256
          %121 = vsyncadd %s115, %s120
          %s122 = smul.addr %s14, 128
          %s123 = scalar_lea.hbm %s0, %s122
          %s124 = sshll.u32 %s118, 4
          %s125 = int_to_ptr.vmem [resolvable:$true] %s124
          %130 = dma.hbm_to_vmem [thread:$0]  %s123, 256, %s125, %s115, 384, 128, 8
        $region20: #{tpu_custom_call.1} parent=15 // pred_fallthru
          _
        // Predicated region
        $region21: #{tpu_custom_call.1} parent=15 // pred_check
          %p131 = pneg %p60
        $region22: #{tpu_custom_call.1} parent=15 // pred_check_branch
          %133 = sbr.rel (%p131) target = $region24
        $region23: #{tpu_custom_call.1} parent=15 // pred_region
          %p134 = scmp.lt.s32.totalorder %s14, 2
          %s135 = scalar_select %p134, %s14, 2
          %s136 = scalar_lea.vmem %s1, %s135
        $region24: #{tpu_custom_call.1} parent=15 // pred_fallthru
          _
      $region16: #{tpu_custom_call.1} parent=5 // pred_fallthru
        _
      %p137 = scmp.le.s32.totalorder 1, %s14
      %p138 = scmp.lt.s32.totalorder %s14, 4
      %p139 = pnand %p137, %p138
      %p140 = pneg %p139
      // Predicated region
      $region25: #{tpu_custom_call.1} parent=5 // pred_check
        _
      $region26: #{tpu_custom_call.1} parent=5 // pred_check_branch
        %142 = sbr.rel (%p139) target = $region28
      $region27: #{tpu_custom_call.1} parent=5 // pred_region
        %s143 = ssub.s32 %s14, 1
        %s144 = sand.u32 %s27, 1
        %s145 = scalar_lea.sflag [#allocation3], %s144
        %s146 = sand.u32 %s27, 1
        %s147 = smul.addr %s146, 16
        %s148 = scalar_lea.vmem [#allocation2], %s147
        // Predicated region
        $region29: #{tpu_custom_call.1} parent=27 // pred_check
          %p149 = pneg %p40
        $region30: #{tpu_custom_call.1} parent=27 // pred_check_branch
          %151 = sbr.rel (%p149) target = $region32
        $region31: #{tpu_custom_call.1} parent=27 // pred_region
          %152 = dma.done %s145, 256
        $region32: #{tpu_custom_call.1} parent=27 // pred_fallthru
          _
        %s153 = sand.u32 %s27, 1
        %s154 = scalar_lea.sflag [#allocation3], %s153
        %s155 = sand.u32 %s27, 1
        %s156 = smul.addr %s155, 16
        %s157 = scalar_lea.vmem [#allocation2], %s156
        %p158 = pneg %p40
        %p159 = pneg %p37
        %p160 = scmp.lt.s32.totalorder %s19, 2
        %s161 = scalar_select %p160, %s19, 2
        %s162 = scalar_lea.vmem %s1, %s161
        %p163 = pneg %p66
        %p164 = pneg %p63
        %p165 = pneg %p92
        %p166 = pneg %p89
        %s167 = sand.u32 %s79, 1
        %s168 = scalar_lea.sflag [#allocation4], %s167
        %s169 = sand.u32 %s79, 1
        %s170 = scalar_lea.vmem [#allocation5], %s169
        %p171 = scmp.lt.s32.totalorder %s19, 2
        %s172 = scalar_select %p171, %s19, 2
        %s173 = scalar_lea.vmem %s1, %s172
        %v174 = vld [vmem:[%s148] sm:$0xff]
        %v175 = vld [vmem:[%s148 + $0x8] sm:$0xff]
        %v176 = vld [vmem:[%s173] sm:$0x1]
        %v177 = vmax.f32 %v174, %v175
        %v178 = vrot.slane %v177, 4
        %v179 = vmax.f32 %v177, %v178
        %v180 = vrot.slane %v179, 2
        %v181 = vmax.f32 %v179, %v180
        %v182 = vrot.slane %v181, 1
        %v183 = vmax.f32 %v181, %v182
        %v184 = vsub.f32 %v174, %v183
        %v185 = vsub.f32 %v175, %v183
        %v186 = vmul.f32 %v184, 1.442695
        %v187 = vpow.pop %v186
        %v188 = vmul.f32 %v185, 1.442695
        %v189 = vpow.pop %v188
        %v190 = vadd.f32 %v187, %v189
        %v191 = vrot.slane %v190, 4
        %v192 = vadd.f32 %v190, %v191
        %v193 = vrot.slane %v192, 2
        %v194 = vadd.f32 %v192, %v193
        %v195 = vrot.slane %v194, 1
        %v196 = vadd.f32 %v194, %v195
        %v197 = vlog2.pop %v196
        %v198 = vmul.f32 %v197, 0.6931472
        %v199 = vadd.f32 %v183, %v198
        %v200 = vlaneseq
        %v201 = vshrl.u32 %v200, 7
        %v202 = vadd.s32 %v201, 8
        %v203 = vlaneseq
        %v204 = vshrl.u32 %v203, 7
        %v205 = vsub.s32 0, %v204
        %v206 = vrot.slane %v176, %v205
        %vm207 = vcmp.eq.s32.totalorder %v201, %v206
        %vm208 = vcmp.eq.s32.totalorder %v202, %v206
        %v209 = vsel %vm207, %v174, 0.0
        %v210 = vsel %vm208, %v175, 0.0
        %v211 = vadd.f32 %v209, %v210
        %v212 = vrot.slane %v211, 4
        %v213 = vadd.f32 %v211, %v212
        %v214 = vrot.slane %v213, 2
        %v215 = vadd.f32 %v213, %v214
        %v216 = vrot.slane %v215, 1
        %v217 = vadd.f32 %v215, %v216
        %v218 = vsub.f32 %v199, %v217
        %v219 = vlaneseq
        %v220 = vshrl.u32 %v219, 7
        %v221 = vsub.s32 0, %v220
        %v222 = vrot.slane %v174, %v221
        %v223 = vsub.f32 %v222, %v174
        %v224 = vsub.f32 %v222, %v175
        %v225 = vsub.f32 1.0, %v223
        %v226 = vsub.f32 1.0, %v224
        %v227 = vmax.f32 %v225, 0.0
        %v228 = vmax.f32 %v226, 0.0
        %v229 = vadd.f32 %v227, %v228
        %v230 = vrot.slane %v229, 4
        %v231 = vadd.f32 %v229, %v230
        %v232 = vrot.slane %v231, 2
        %v233 = vadd.f32 %v231, %v232
        %v234 = vrot.slane %v233, 1
        %v235 = vadd.f32 %v233, %v234
        %v236 = vsub.f32 %v235, 1.0
        %s237 = smul.u32 %s19, 128
        %v238 = vlaneseq
        %v239 = vand.u32 %v238, 127
        %v240 = vstv %s237
        %v241 = vadd.s32 %v240, %v239
        %vm242 = vcmp.lt.s32.totalorder %v241, 300
        %v243 = vsel %vm242, 1, 0
        %v244 = vcvt.s32.f32 %v243
        %v245 = vmul.f32 %v218, 0.0033333334
        %v246 = vmul.f32 %v236, 0.00022222222
        %v247 = vadd.f32 %v245, %v246
        %v248 = vmul.f32 %v244, %v247
        %249 = vst [vmem:[%s170] sm:$0x1] %v248
        %s250 = sand.u32 %s79, 1
        %s251 = scalar_lea.sflag [#allocation4], %s250
        %s252 = sand.u32 %s79, 1
        %s253 = scalar_lea.vmem [#allocation5], %s252
        // Predicated region
        $region33: #{tpu_custom_call.1} parent=27 // pred_check
          %p254 = pneg %p89
        $region34: #{tpu_custom_call.1} parent=27 // pred_check_branch
          %256 = sbr.rel (%p254) target = $region36
        $region35: #{tpu_custom_call.1} parent=27 // pred_region
          %s258 = ssub.s32 16, 16
          %259 = vsyncadd %s251, %s258
          %s260 = smul.addr %s19, 16
          %s261 = scalar_lea.hbm %s2, %s260
          %s263 = sshll.u32 %s253, 4
          %s264 = int_to_ptr.vmem [resolvable:$true] %s263
          %266 = dma.vmem_to_hbm [thread:$0]  %s264, 16, %s261, %s251
        $region36: #{tpu_custom_call.1} parent=27 // pred_fallthru
          _
      $region28: #{tpu_custom_call.1} parent=5 // pred_fallthru
        _
      %p267 = scmp.le.s32.totalorder 2, %s14
      // Predicated region
      $region37: #{tpu_custom_call.1} parent=5 // pred_check
        %p268 = pneg %p267
      $region38: #{tpu_custom_call.1} parent=5 // pred_check_branch
        %270 = sbr.rel (%p268) target = $region40
      $region39: #{tpu_custom_call.1} parent=5 // pred_region
        %s271 = ssub.s32 %s14, 2
        // Predicated region
        $region41: #{tpu_custom_call.1} parent=39 // pred_check
          %p272 = pneg %p95
        $region42: #{tpu_custom_call.1} parent=39 // pred_check_branch
          %274 = sbr.rel (%p272) target = $region44
        $region43: #{tpu_custom_call.1} parent=39 // pred_region
          %s275 = sand.u32 %s80, 1
          %s276 = scalar_lea.sflag [#allocation4], %s275
          %s277 = sand.u32 %s80, 1
          %s278 = scalar_lea.vmem [#allocation5], %s277
          %279 = dma.done %s276, 16
        $region44: #{tpu_custom_call.1} parent=39 // pred_fallthru
          _
      $region40: #{tpu_custom_call.1} parent=5 // pred_fallthru
        _
    $region6: #{tpu_custom_call.1} parent=1 // loop_footer
      %s18 = sadd.s32 1, %s14
    $region7: #{tpu_custom_call.1} parent=1 // loop_footer_branch
      %13 = sbr.rel target = $region3
    $region8: #{tpu_custom_call.1} parent=1 // loop_exit
      _
    %280 = vsyncpa [#allocation3], 1
    %s281 = scalar_lea.sflag [#allocation3], 1
    %282 = vsyncpa %s281, 1
    %283 = vsyncpa [#allocation4], 1
    %s284 = scalar_lea.sflag [#allocation4], 1
    %285 = vsyncpa %s284, 1

</llo_original>
